<compile_context>
chip_gen: v6e
topology: v6e:2x2x1
jax: 0.10.0
libtpu: 0.0.40
codegen_flags: <defaults>
</compile_context>

<pallas_src>
import functools

import jax
import jax.numpy as jnp
from jax import lax
from jax.experimental import pallas as pl
from jax.experimental.pallas import tpu as pltpu


# ---------------------------------------------------------------------------
# Small helpers
# ---------------------------------------------------------------------------
def _round_up(x, m):
    return ((x + m - 1) // m) * m


def _vmem_ceiling_bytes():
    """Chip-aware scoped-VMEM request (~55% of physical VMEM per core)."""
    try:
        cap = int(getattr(pltpu.get_tpu_info(), "vmem_capacity_bytes", 0) or 0)
    except Exception:
        cap = 0
    if cap <= 0:
        cap = 64 * 1024 * 1024                        # conservative (v7x-sized VMEM)
    return max(16 * 1024 * 1024, min(int(0.55 * cap), 96 * 1024 * 1024))


def _fused_tile_bytes(th, W, Cin, Cpre, r, in_b, out_b):
    """Generous per-grid-step VMEM estimate for the fused kernel: double-buffered
    I/O tiles + in-kernel temporaries, including (8,128) layout padding."""
    cout = Cpre // (r * r)
    thr, wr = th * r, W * r
    lane = lambda v: _round_up(v, 128)
    sub = lambda v: _round_up(v, 8)
    x_tile = Cin * sub(th) * lane(W) * in_b            # input pipeline buffer
    o_tile = cout * sub(thr) * lane(wr) * out_b        # output pipeline buffer
    x_up = Cin * sub(th) * lane(wr) * 4                # column-replicated input (f32)
    row_rep = Cin * sub(th) * 8 * lane(wr) * in_b      # row-replication intermediate
    acc = cout * sub(thr) * lane(wr) * 4               # accumulator / per-phase result
    wgt = 2 * Cpre * (Cin * in_b + 8)
    return 2 * (x_tile + o_tile) + 2 * x_up + row_rep + 3 * acc + wgt


def _choose_row_tile(H, W, Cin, Cpre, r, in_b, out_b, budget, want_split):
    """Largest image-row tile (multiple of 8, or the whole image) within budget.
    When want_split, prefer >= 2 spatial grid steps (megacore sharding)."""
    cands = list(range((H // 8) * 8, 0, -8))
    if H % 8 != 0:
        cands = [H] + cands                            # whole-image tile is always legal
    if want_split and H > 8:
        split = [t for t in cands if t < H]
        if split:
            cands = split
    for th in cands:
        if _fused_tile_bytes(th, W, Cin, Cpre, r, in_b, out_b) <= budget:
            return th
    return cands[-1]


# ---------------------------------------------------------------------------
# Fused kernel: 1x1 conv (channel matmul) + bias + ReLU + PixelShuffle(r)
# ---------------------------------------------------------------------------
def _fused_conv_shuffle_kernel(x_ref, w_ref, b_ref, o_ref, *, r):
    # x_ref: (Cin, th, W)       burst-0 activation tile (th whole image rows)
    # w_ref: (r*r, Cout, Cin)   conv weight, grouped by sub-pixel phase k = i*r+j
    # b_ref: (r*r, Cout, 1)     bias (f32), same grouping
    # o_ref: (Cout, th*r, W*r)  final pixel-shuffled output tile
    cin, th, w = x_ref.shape
    cout = w_ref.shape[1]
    thr, wr = th * r, w * r
    n = thr * wr

    xv = x_ref[...]
    x_dt = xv.dtype

    # --- nearest-neighbour COLUMN replication by r via chunked one-hot matmuls
    #     (exact copies in any dtype; keeps extra MXU work linear in W). ---
    xw = xv.reshape(cin * th, w)
    chunk = min(w, 128)
    pieces = []
    for c0 in range(0, w, chunk):
        cw = min(chunk, w - c0)
        src = lax.broadcasted_iota(jnp.int32, (cw, cw * r), 0)
        dst = lax.broadcasted_iota(jnp.int32, (cw, cw * r), 1) // r
        rep = (src == dst).astype(x_dt)
        pieces.append(jnp.dot(xw[:, c0:c0 + cw], rep,
                              preferred_element_type=jnp.float32))
    x_up = jnp.concatenate(pieces, axis=-1).astype(x_dt)      # (cin*th, W*r)

    # --- nearest-neighbour ROW replication by r (broadcast + sublane merge). ---
    x_up = x_up.reshape(cin, th, wr)
    x_up = jnp.broadcast_to(x_up[:, :, None, :], (cin, th, r, wr)).reshape(cin, n)

    # --- sub-pixel phase of every output element (lane-index arithmetic). ---
    col = lax.broadcasted_iota(jnp.int32, (1, n), 1)
    i_phase = (col // wr) % r
    j_phase = (col % wr) % r

    # --- r^2 phase-masked 1x1-conv matmuls accumulated in shuffled layout. ---
    out = jnp.zeros((cout, n), dtype=jnp.float32)
    for i in range(r):
        for j in range(r):
            k = i * r + j
            acc = jnp.dot(w_ref[k], x_up, preferred_element_type=jnp.float32)
            acc = acc + b_ref[k]
            sel = jnp.logical_and(i_phase == i, j_phase == j)
            out = jnp.where(sel, acc, out)
    out = jnp.maximum(out, 0.0)

    o_ref[...] = out.reshape(cout, thr, wr).astype(o_ref.dtype)


def _forward_fused(x5d, w_full, bias, r, *, out_dtype=None):
    B, Nb, Cin, H, W = x5d.shape
    Cpre = w_full.shape[0]
    Cout = Cpre // (r * r)
    assert Cpre == Cout * r * r, (Cpre, r)
    odt = jnp.dtype(out_dtype) if out_dtype is not None else jnp.dtype(x5d.dtype)
    in_b, out_b = jnp.dtype(x5d.dtype).itemsize, odt.itemsize

    ceiling = _vmem_ceiling_bytes()
    th = _choose_row_tile(H, W, Cin, Cpre, r, in_b, out_b,
                          budget=int(0.8 * ceiling), want_split=(B == 1))
    n_t = pl.cdiv(H, th)

    # Tiny parameter re-layouts (free): group weight/bias rows by sub-pixel phase.
    w_rr = w_full.astype(x5d.dtype).reshape(Cout, r * r, Cin).transpose(1, 0, 2)
    b_rr = bias.astype(jnp.float32).reshape(Cout, r * r).T[:, :, None]

    flops = 2 * B * H * W * Cin * Cpre
    bytes_accessed = (B * Cin * H * W * in_b + Cpre * Cin * in_b
                      + B * Cpre * H * W * out_b)

    kernel = functools.partial(_fused_conv_shuffle_kernel, r=r)
    return pl.pallas_call(
        kernel,
        out_shape=jax.ShapeDtypeStruct((B, Cout, H * r, W * r), odt),
        grid_spec=pltpu.PrefetchScalarGridSpec(
            num_scalar_prefetch=0,
            grid=(B, n_t),
            in_specs=[
                # batch b, burst 0 only (squeezed) -> kernel sees (Cin, th, W);
                # ragged last row-block relies on Pallas partial-block masking.
                pl.BlockSpec((None, None, Cin, th, W), lambda b, t: (b, 0, 0, t, 0)),
                # Grid-invariant weight/bias stay resident (double-buffering them
                # costs only a few KiB, so no pipeline_mode override needed).
                pl.BlockSpec((r * r, Cout, Cin), lambda b, t: (0, 0, 0)),
                pl.BlockSpec((r * r, Cout, 1), lambda b, t: (0, 0, 0)),
            ],
            out_specs=pl.BlockSpec((None, Cout, th * r, W * r),
                                   lambda b, t: (b, 0, t, 0)),
        ),
        compiler_params=pltpu.CompilerParams(
            dimension_semantics=("parallel", "parallel"),
            vmem_limit_bytes=int(ceiling)),
        cost_estimate=pl.CostEstimate(flops=flops, transcendentals=0,
                                      bytes_accessed=bytes_accessed),
    )(x5d, w_rr, b_rr)


# ---------------------------------------------------------------------------
# Fallback path: lane-dense conv kernel + XLA-side PixelShuffle transpose.
# Only used if the fused kernel fails to lower on the current toolchain.
# ---------------------------------------------------------------------------
def _conv1x1_bias_relu_kernel(x_ref, w_ref, b_ref, o_ref):
    acc = jnp.dot(w_ref[...], x_ref[...], preferred_element_type=jnp.float32)
    o_ref[...] = jnp.maximum(acc + b_ref[...], 0.0).astype(o_ref.dtype)


def _forward_unfused(x5d, w_full, bias, r, *, out_dtype=None):
    B, Nb, Cin, H, W = x5d.shape
    Cpre = w_full.shape[0]
    Cout = Cpre // (r * r)
    odt = jnp.dtype(out_dtype) if out_dtype is not None else jnp.dtype(x5d.dtype)
    in_b, out_b = jnp.dtype(x5d.dtype).itemsize, odt.itemsize
    HW = H * W

    ceiling = _vmem_ceiling_bytes()
    per_col = 2 * (Cin * in_b + Cpre * out_b) + 4 * Cpre
    tm = (int(0.8 * ceiling) // per_col) // 128 * 128
    tm = max(128, min(_round_up(HW, 128), tm))
    HWp = _round_up(HW, tm)

    if HWp == HW:
        x_in = x5d.reshape(B, Nb, Cin, HW)            # zero-copy view; burst 0 via index_map
        x_spec = pl.BlockSpec((None, None, Cin, tm), lambda b, t: (b, 0, 0, t))
    else:
        x_in = jnp.pad(x5d[:, 0].reshape(B, Cin, HW),
                       ((0, 0), (0, 0), (0, HWp - HW)))
        x_spec = pl.BlockSpec((None, Cin, tm), lambda b, t: (b, 0, t))

    w_mat = w_full.astype(x5d.dtype)
    b_col = bias.astype(jnp.float32).reshape(Cpre, 1)

    y = pl.pallas_call(
        _conv1x1_bias_relu_kernel,
        out_shape=jax.ShapeDtypeStruct((B, Cpre, HWp), odt),
        grid_spec=pltpu.PrefetchScalarGridSpec(
            num_scalar_prefetch=0,
            grid=(B, HWp // tm),
            in_specs=[x_spec,
                      pl.BlockSpec((Cpre, Cin), lambda b, t: (0, 0)),
                      pl.BlockSpec((Cpre, 1), lambda b, t: (0, 0))],
            out_specs=pl.BlockSpec((None, Cpre, tm), lambda b, t: (b, 0, t)),
        ),
        compiler_params=pltpu.CompilerParams(
            dimension_semantics=("parallel", "parallel"),
            vmem_limit_bytes=int(ceiling)),
    )(x_in, w_mat, b_col)

    y = y[:, :, :HW].reshape(B, Cout, r, r, H, W)
    y = jnp.transpose(y, (0, 1, 4, 2, 5, 3))          # extra HBM pass (fallback only)
    return y.reshape(B, Cout, H * r, W * r)


# ---------------------------------------------------------------------------
# Public forward pass of PixelShuffleInitializer
# ---------------------------------------------------------------------------
def pixel_shuffle_initializer_forward(x5d, w_full, bias, r, *,
                                      out_dtype=None, fuse_shuffle=True):
    """x5d: (B, N_burst, Cin, H, W); w_full: (Cout*r^2, Cin); bias: (Cout*r^2,).
    Returns (B, Cout, H*r, W*r) in out_dtype (defaults to x5d.dtype)."""
    assert x5d.ndim == 5
    if fuse_shuffle:
        try:
            out = _forward_fused(x5d, w_full, bias, r, out_dtype=out_dtype)
            jax.block_until_ready(out)   # surface lowering/compile errors here (eager use)
            return out
        except Exception:
            # TODO(synk): drop this fallback once the in-kernel shuffle lowers on
            # every supported toolchain.
            pass
    return _forward_unfused(x5d, w_full, bias, r, out_dtype=out_dtype)


# ---------------------------------------------------------------------------
# Deterministic ICNR init + pure-JAX reference (mirrors the PyTorch ops)
# ---------------------------------------------------------------------------
def icnr_weight(key, c_in, c_out, r):
    """ICNR: every sub-pixel phase starts identical (no checkerboard)."""
    base = jax.random.normal(key, (c_out, c_in), dtype=jnp.float32)
    base = base * (1.0 / jnp.sqrt(jnp.float32(c_in)))
    return jnp.repeat(base, r * r, axis=0)            # (c_out * r^2, c_in)


def _reference_forward(x5d, w_full, bias, r):
    B, Nb, Cin, H, W = x5d.shape
    Cpre = w_full.shape[0]
    Cout = Cpre // (r * r)
    x_ref = x5d[:, 0]
    y = jnp.einsum("bchw,nc->bnhw", x_ref, w_full) + bias[None, :, None, None]
    y = jnp.maximum(y, 0.0)
    y = y.reshape(B, Cout, r, r, H, W)                 # torch.nn.PixelShuffle (NCHW)
    y = jnp.transpose(y, (0, 1, 4, 2, 5, 3))
    return y.reshape(B, Cout, H * r, W * r)


if __name__ == "__main__":
    key = jax.random.PRNGKey(0)
    kx, kw, kb, kx2, kw2, kb2 = jax.random.split(key, 6)

    # Case 1: shapes consistent with the module's 5-D burst input (f32).
    B, Nb, Cin, H, W = 2, 3, 32, 16, 16
    Cout, r = 8, 2
    x = jax.random.normal(kx, (B, Nb, Cin, H, W), dtype=jnp.float32)
    w_full = icnr_weight(kw, Cin, Cout, r)                       # (Cout*r^2, Cin)
    bias = 0.01 * jax.random.normal(kb, (Cout * r * r,), dtype=jnp.float32)

    out = jax.block_until_ready(pixel_shuffle_initializer_forward(x, w_full, bias, r))
    assert out.shape == (B, Cout, H * r, W * r), out.shape
    ref = _reference_forward(x, w_full, bias, r)
    assert jnp.allclose(out, ref, atol=1e-5, rtol=1e-5), "f32 mismatch vs reference"

    # Case 2: ragged H (not a multiple of 8) exercises partial row-block masking
    # and the B==1 forced 2-step spatial grid.
    B2, Nb2, Cin2, H2, W2, Cout2, r2 = 1, 2, 16, 10, 10, 4, 3
    x2 = jax.random.normal(kx2, (B2, Nb2, Cin2, H2, W2), dtype=jnp.float32)
    w2 = icnr_weight(kw2, Cin2, Cout2, r2)
    b2 = 0.01 * jax.random.normal(kb2, (Cout2 * r2 * r2,), dtype=jnp.float32)
    out2 = jax.block_until_ready(pixel_shuffle_initializer_forward(x2, w2, b2, r2))
    assert out2.shape == (B2, Cout2, H2 * r2, W2 * r2), out2.shape
    ref2 = _reference_forward(x2, w2, b2, r2)
    assert jnp.allclose(out2, ref2, atol=1e-5, rtol=1e-5), "ragged mismatch vs reference"

    # Case 3: bf16 output path (halves output HBM traffic; f32 accumulation kept).
    out_bf16 = jax.block_until_ready(
        pixel_shuffle_initializer_forward(x, w_full, bias, r, out_dtype=jnp.bfloat16))
    assert out_bf16.dtype == jnp.bfloat16
    assert jnp.allclose(out_bf16.astype(jnp.float32), ref, atol=5e-2, rtol=5e-2), \
        "bf16-output mismatch vs reference"

    print("KERNEL_OK")
</pallas_src>

<mosaic_0001>
module attributes {stable_mosaic.version = 11 : i64} {
  func.func @_conv1x1_bias_relu_kernel(%arg0: i32, %arg1: i32, %arg2: memref<1x1x32x256xf32, #tpu.memory_space<vmem>>, %arg3: memref<32x32xf32, #tpu.memory_space<vmem>>, %arg4: memref<32x1xf32, #tpu.memory_space<vmem>>, %arg5: memref<1x32x256xf32, #tpu.memory_space<vmem>>) attributes {dimension_semantics = [#tpu.dimension_semantics<parallel>, #tpu.dimension_semantics<parallel>], iteration_bounds = array<i64: 2, 1>, scalar_prefetch = 0 : i64, scratch_operands = 0 : i64, tpu.core_type = #tpu.core_type<tc>, window_params = [{transform_indices = @transform_0, window_bounds = array<i64: 1, 1, 32, 256>}, {pipeline_mode = #tpu.pipeline_mode<synchronous>, transform_indices = @transform_1, window_bounds = array<i64: 32, 32>}, {pipeline_mode = #tpu.pipeline_mode<synchronous>, transform_indices = @transform_2, window_bounds = array<i64: 32, 1>}, {transform_indices = @transform_3, window_bounds = array<i64: 1, 32, 256>}]} {
    %c0 = arith.constant 0 : index
    %c0_0 = arith.constant 0 : index
    %0 = vector.load %arg3[%c0, %c0_0] : memref<32x32xf32, #tpu.memory_space<vmem>>, vector<32x32xf32>
    %c0_1 = arith.constant 0 : index
    %c0_2 = arith.constant 0 : index
    %c0_3 = arith.constant 0 : index
    %c0_4 = arith.constant 0 : index
    %1 = vector.load %arg2[%c0_1, %c0_2, %c0_3, %c0_4] : memref<1x1x32x256xf32, #tpu.memory_space<vmem>>, vector<1x1x32x256xf32>
    %2 = vector.shape_cast %1 : vector<1x1x32x256xf32> to vector<32x256xf32>
    %cst = arith.constant dense<0.000000e+00> : vector<32x256xf32>
    %3 = tpu.matmul %0, %2, %cst {dimension_numbers = #tpu.dot_dimension_numbers<[1], [0], [0], [1], [0, 0, 1, 1], [], []>} : vector<32x32xf32>, vector<32x256xf32>, vector<32x256xf32> -> vector<32x256xf32>
    %c0_5 = arith.constant 0 : index
    %c0_6 = arith.constant 0 : index
    %4 = vector.load %arg4[%c0_5, %c0_6] : memref<32x1xf32, #tpu.memory_space<vmem>>, vector<32x1xf32>
    %5 = vector.broadcast %4 : vector<32x1xf32> to vector<32x256xf32>
    %6 = arith.addf %3, %5 : vector<32x256xf32>
    %cst_7 = arith.constant 0.000000e+00 : f32
    %7 = vector.broadcast %cst_7 : f32 to vector<32x256xf32>
    %8 = arith.maximumf %6, %7 : vector<32x256xf32>
    %c0_8 = arith.constant 0 : index
    %c0_9 = arith.constant 0 : index
    %c0_10 = arith.constant 0 : index
    %9 = vector.load %arg5[%c0_8, %c0_9, %c0_10] : memref<1x32x256xf32, #tpu.memory_space<vmem>>, vector<1x32x256xf32>
    %10 = vector.shape_cast %9 : vector<1x32x256xf32> to vector<32x256xf32>
    %11 = vector.shape_cast %8 : vector<32x256xf32> to vector<1x32x256xf32>
    tpu.vector_store %arg5[%c0_8, %c0_9, %c0_10], %11 {strides = array<i32>} : memref<1x32x256xf32, #tpu.memory_space<vmem>>, vector<1x32x256xf32>,
    return
  }
  func.func @transform_0(%arg0: i32, %arg1: i32) -> (i32, i32, i32, i32) {
    %c0_i32 = arith.constant 0 : i32
    %c0_i32_0 = arith.constant 0 : i32
    %c0_i32_1 = arith.constant 0 : i32
    return %arg0, %c0_i32, %c0_i32_0, %arg1 : i32, i32, i32, i32
  }
  func.func @transform_1(%arg0: i32, %arg1: i32) -> (i32, i32) {
    %c0_i32 = arith.constant 0 : i32
    %c0_i32_0 = arith.constant 0 : i32
    %c0_i32_1 = arith.constant 0 : i32
    return %c0_i32, %c0_i32_0 : i32, i32
  }
  func.func @transform_2(%arg0: i32, %arg1: i32) -> (i32, i32) {
    %c0_i32 = arith.constant 0 : i32
    %c0_i32_0 = arith.constant 0 : i32
    %c0_i32_1 = arith.constant 0 : i32
    return %c0_i32, %c0_i32_0 : i32, i32
  }
  func.func @transform_3(%arg0: i32, %arg1: i32) -> (i32, i32, i32) {
    %c0_i32 = arith.constant 0 : i32
    %c0_i32_0 = arith.constant 0 : i32
    return %arg0, %c0_i32, %arg1 : i32, i32, i32
  }
}

</mosaic_0001>

<llo_original>
// kernel: tpu_custom_call.1
$region0: #{tpu_custom_call.1}
  #allocation0 [shape = 'u32[]', space=smem, size = 0x4, offset = 0x4, fixed_abs, tag = 'smem constant byte address 0x4 - core index']
  #allocation1 [shape = 'u32[144,128]{1,0:T(1,128)}', space=vmem, size = 0x12000, scoped, tag = 'internal scratch']
  %s0 = inlined_call_operand.hbm [shape: f32[2,3,32,256], index: 0, kind: input, shape index: {}]
  %s1 = inlined_call_operand.vmem [shape: f32[32,32], index: 1, kind: input, shape index: {}]
  %s2 = inlined_call_operand.vmem [shape: f32[32,1], index: 2, kind: input, shape index: {}]
  %s3 = inlined_call_operand.hbm [shape: f32[2,32,256], index: 3, kind: output, shape index: {}]
  %s4 = sld [smem:[#allocation0]]
  $region49: #{tpu_custom_call.1} parent=0
    _
  %s6 = ssub.s32 1, %s4
  %s7 = scalar_select 0, %s6, %s4
  $region1: #{tpu_custom_call.1} parent=0
    #allocation2 [shape = 'u8[65536]{0}', space=vmem, size = 0x10000, scoped, tag = 'input window, operand 0']
    #allocation3 [shape = 's32[2]{0}', space=sflag, size = 0x8, scoped, tag = 'scoped memory for tpu_custom_call.1']
    #allocation4 [shape = 's32[2]{0}', space=sflag, size = 0x8, scoped, tag = 'scoped memory for tpu_custom_call.1']
    #allocation5 [shape = 'u8[65536]{0}', space=vmem, size = 0x10000, scoped, tag = 'output window, operand 0']
    %8 = vsyncpa [#allocation3], 0
    %s9 = scalar_lea.sflag [#allocation3], 1
    %10 = vsyncpa %s9, 0
    %11 = vsyncpa [#allocation4], 0
    %s12 = scalar_lea.sflag [#allocation4], 1
    %13 = vsyncpa %s12, 0
    loop: start=0, step=1, limit=4
    $region2: #{tpu_custom_call.1} parent=1 // loop_pre_header
      _
    $region3: #{tpu_custom_call.1} parent=1 // loop_header
      %s15 = sphi 0, %s19
      %p16 = scmp.ge.s32.totalorder %s15, 4
      %s22 = sphi 0, %s34
      %s23 = sphi 0, %s30
      %s24 = sphi 0, %s22
      %s25 = sphi 0, %s23
      %s26 = sphi 0, %s24
      %s27 = sphi 0, %s25
      %s39 = sphi 0, %s41
      %s42 = sphi 0, %s39
      %s43 = sphi 0, %s42
      %s59 = sphi 0, %s43
      %s63 = sphi 0, %s63
      %s65 = sphi 0, %s63
      %s66 = sphi 0, %s65
      %s80 = sphi 0, %s66
      %s84 = sphi 0, %s84
      %s86 = sphi 0, %s84
      %s87 = sphi 0, %s86
      %s101 = sphi 0, %s87
      %s109 = sphi 0, %s111
      %s112 = sphi 0, %s109
      %s113 = sphi 0, %s112
      %s129 = sphi 0, %s113
    $region4: #{tpu_custom_call.1} parent=1 // loop_header_branch
      %18 = sbr.rel (%p16) target = $region8
    $region5: #{tpu_custom_call.1} parent=1 // loop_body
      %s20 = ssub.s32 %s15, 1
      %s21 = ssub.s32 %s15, 2
      %s28 = sadd.s32 1, %s23
      %p29 = scmp.ge.s32.totalorder %s28, 1
      %s30 = scalar_select %p29, 0, %s28
      %s31 = sadd.s32 1, %s22
      %s32 = scalar_select %p29, %s31, %s22
      %p33 = scmp.ge.s32.totalorder %s32, 2
      %s34 = scalar_select %p33, 0, %s32
      %s35 = ssub.s32 %s22, %s34
      %s36 = ssub.s32 %s23, %s30
      %s37 = sor.u32 %s35, %s36
      %p38 = scmp.eq.s32.totalorder %s37, 0
      %s40 = sadd.s32 %s39, 1
      %s41 = scalar_select %p38, %s39, %s40
      %p44 = pneg %p38
      %p45 = scmp.eq.s32.totalorder %s15, 1
      %p46 = por %p44, %p45
      %p47 = scmp.ne.s32.totalorder %s39, %s42
      %p48 = scmp.eq.s32.totalorder %s15, 0
      %p49 = por %p47, %p48
      %p50 = scmp.ne.s32.totalorder %s39, %s42
      %p51 = scmp.eq.s32.totalorder %s20, 1
      %p52 = por %p50, %p51
      %p53 = scmp.ne.s32.totalorder %s42, %s43
      %p54 = scmp.eq.s32.totalorder %s20, 0
      %p55 = por %p53, %p54
      %p56 = scmp.ne.s32.totalorder %s42, %s43
      %p57 = scmp.eq.s32.totalorder %s21, 1
      %p58 = por %p56, %p57
      %p60 = scmp.ne.s32.totalorder %s43, %s59
      %p61 = scmp.eq.s32.totalorder %s21, 0
      %p62 = por %p60, %p61
      %s64 = sadd.s32 %s63, 1
      %p67 = scmp.eq.s32.totalorder %s15, 1
      %p68 = scmp.ne.s32.totalorder %s63, %s65
      %p69 = scmp.eq.s32.totalorder %s15, 0
      %p70 = por %p68, %p69
      %p71 = scmp.ne.s32.totalorder %s63, %s65
      %p72 = scmp.eq.s32.totalorder %s20, 1
      %p73 = por %p71, %p72
      %p74 = scmp.ne.s32.totalorder %s65, %s66
      %p75 = scmp.eq.s32.totalorder %s20, 0
      %p76 = por %p74, %p75
      %p77 = scmp.ne.s32.totalorder %s65, %s66
      %p78 = scmp.eq.s32.totalorder %s21, 1
      %p79 = por %p77, %p78
      %p81 = scmp.ne.s32.totalorder %s66, %s80
      %p82 = scmp.eq.s32.totalorder %s21, 0
      %p83 = por %p81, %p82
      %s85 = sadd.s32 %s84, 1
      %p88 = scmp.eq.s32.totalorder %s15, 1
      %p89 = scmp.ne.s32.totalorder %s84, %s86
      %p90 = scmp.eq.s32.totalorder %s15, 0
      %p91 = por %p89, %p90
      %p92 = scmp.ne.s32.totalorder %s84, %s86
      %p93 = scmp.eq.s32.totalorder %s20, 1
      %p94 = por %p92, %p93
      %p95 = scmp.ne.s32.totalorder %s86, %s87
      %p96 = scmp.eq.s32.totalorder %s20, 0
      %p97 = por %p95, %p96
      %p98 = scmp.ne.s32.totalorder %s86, %s87
      %p99 = scmp.eq.s32.totalorder %s21, 1
      %p100 = por %p98, %p99
      %p102 = scmp.ne.s32.totalorder %s87, %s101
      %p103 = scmp.eq.s32.totalorder %s21, 0
      %p104 = por %p102, %p103
      %s105 = ssub.s32 %s22, %s34
      %s106 = ssub.s32 %s23, %s30
      %s107 = sor.u32 %s105, %s106
      %p108 = scmp.eq.s32.totalorder %s107, 0
      %s110 = sadd.s32 %s109, 1
      %s111 = scalar_select %p108, %s109, %s110
      %p114 = pneg %p108
      %p115 = scmp.eq.s32.totalorder %s15, 1
      %p116 = por %p114, %p115
      %p117 = scmp.ne.s32.totalorder %s109, %s112
      %p118 = scmp.eq.s32.totalorder %s15, 0
      %p119 = por %p117, %p118
      %p120 = scmp.ne.s32.totalorder %s109, %s112
      %p121 = scmp.eq.s32.totalorder %s20, 1
      %p122 = por %p120, %p121
      %p123 = scmp.ne.s32.totalorder %s112, %s113
      %p124 = scmp.eq.s32.totalorder %s20, 0
      %p125 = por %p123, %p124
      %p126 = scmp.ne.s32.totalorder %s112, %s113
      %p127 = scmp.eq.s32.totalorder %s21, 1
      %p128 = por %p126, %p127
      %p130 = scmp.ne.s32.totalorder %s113, %s129
      %p131 = scmp.eq.s32.totalorder %s21, 0
      %p132 = por %p130, %p131
      %p133 = scmp.le.s32.totalorder 1, %s15
      %p134 = scmp.lt.s32.totalorder %s15, 3
      %p135 = pnand %p133, %p134
      %p136 = pneg %p135
      // Predicated region
      $region9: #{tpu_custom_call.1} parent=5 // pred_check
        _
      $region10: #{tpu_custom_call.1} parent=5 // pred_check_branch
        %138 = sbr.rel (%p135) target = $region12
      $region11: #{tpu_custom_call.1} parent=5 // pred_region
        %s139 = ssub.s32 %s15, 1
        // Predicated region
        $region13: #{tpu_custom_call.1} parent=11 // pred_check
          %p140 = pneg %p76
        $region14: #{tpu_custom_call.1} parent=11 // pred_check_branch
          %142 = sbr.rel (%p140) target = $region16
        $region15: #{tpu_custom_call.1} parent=11 // pred_region
          _
        $region16: #{tpu_custom_call.1} parent=11 // pred_fallthru
          _
        // Predicated region
        $region17: #{tpu_custom_call.1} parent=11 // pred_check
          %p143 = pneg %p97
        $region18: #{tpu_custom_call.1} parent=11 // pred_check_branch
          %145 = sbr.rel (%p143) target = $region20
        $region19: #{tpu_custom_call.1} parent=11 // pred_region
          _
        $region20: #{tpu_custom_call.1} parent=11 // pred_fallthru
          _
      $region12: #{tpu_custom_call.1} parent=5 // pred_fallthru
        _
      %p146 = scmp.lt.s32.totalorder %s15, 2
      // Predicated region
      $region21: #{tpu_custom_call.1} parent=5 // pred_check
        %p147 = pneg %p146
      $region22: #{tpu_custom_call.1} parent=5 // pred_check_branch
        %149 = sbr.rel (%p147) target = $region24
      $region23: #{tpu_custom_call.1} parent=5 // pred_region
        // Predicated region
        $region25: #{tpu_custom_call.1} parent=23 // pred_check
          %p150 = pneg %p49
        $region26: #{tpu_custom_call.1} parent=23 // pred_check_branch
          %152 = sbr.rel (%p150) target = $region28
        $region27: #{tpu_custom_call.1} parent=23 // pred_region
          %s153 = sand.u32 %s39, 1
          %s154 = scalar_lea.sflag [#allocation3], %s153
          %s155 = sand.u32 %s39, 1
          %s156 = smul.addr %s155, 64
          %s157 = scalar_lea.vmem [#allocation2], %s156
          %s158 = smul.u32 2, %s23
          %s160 = ssub.s32 1024, 1024
          %161 = vsyncadd %s154, %s160
          %s162 = smul.addr %s22, 24
          %s163 = sadd.s32 %s158, %s162
          %s164 = smul.addr %s163, 128
          %s165 = scalar_lea.hbm %s0, %s164
          %s166 = sshll.u32 %s157, 4
          %s167 = int_to_ptr.vmem [resolvable:$true] %s166
          %172 = dma.hbm_to_vmem [thread:$0]  %s165, 1024, %s167, %s154, 256, 256, 16
        $region28: #{tpu_custom_call.1} parent=23 // pred_fallthru
          _
      $region24: #{tpu_custom_call.1} parent=5 // pred_fallthru
        _
      %p173 = scmp.le.s32.totalorder 1, %s15
      %p174 = scmp.lt.s32.totalorder %s15, 3
      %p175 = pnand %p173, %p174
      %p176 = pneg %p175
      // Predicated region
      $region29: #{tpu_custom_call.1} parent=5 // pred_check
        _
      $region30: #{tpu_custom_call.1} parent=5 // pred_check_branch
        %178 = sbr.rel (%p175) target = $region32
      $region31: #{tpu_custom_call.1} parent=5 // pred_region
        %s179 = ssub.s32 %s15, 1
        %s180 = sand.u32 %s42, 1
        %s181 = scalar_lea.sflag [#allocation3], %s180
        %s182 = sand.u32 %s42, 1
        %s183 = smul.addr %s182, 64
        %s184 = scalar_lea.vmem [#allocation2], %s183
        // Predicated region
        $region33: #{tpu_custom_call.1} parent=31 // pred_check
          %p185 = pneg %p55
        $region34: #{tpu_custom_call.1} parent=31 // pred_check_branch
          %187 = sbr.rel (%p185) target = $region36
        $region35: #{tpu_custom_call.1} parent=31 // pred_region
          %188 = dma.done %s181, 1024
        $region36: #{tpu_custom_call.1} parent=31 // pred_fallthru
          _
        %s189 = sand.u32 %s42, 1
        %s190 = scalar_lea.sflag [#allocation3], %s189
        %s191 = sand.u32 %s42, 1
        %s192 = smul.addr %s191, 64
        %s193 = scalar_lea.vmem [#allocation2], %s192
        %p194 = pneg %p55
        %p195 = pneg %p52
        %p196 = pneg %p76
        %p197 = pneg %p73
        %p198 = pneg %p97
        %p199 = pneg %p94
        %p200 = pneg %p125
        %p201 = pneg %p122
        %s202 = sand.u32 %s112, 1
        %s203 = scalar_lea.sflag [#allocation4], %s202
        %s204 = sand.u32 %s112, 1
        %s205 = smul.addr %s204, 64
        %s206 = scalar_lea.vmem [#allocation5], %s205
        %s207 = smul.u32 2, %s25
        %s208 = smul.u32 2, %s25
        %v209 = vld [vmem:[%s1] sm:$0xff]
        %v210 = vld [vmem:[%s1 + $0x8] sm:$0xff]
        %v211 = vld [vmem:[%s1 + $0x10] sm:$0xff]
        %v212 = vld [vmem:[%s1 + $0x18] sm:$0xff]
        %v213 = vld [vmem:[%s184] sm:$0xff]
        %v214 = vld [vmem:[%s184 + $0x8] sm:$0xff]
        %v215 = vld [vmem:[%s184 + $0x10] sm:$0xff]
        %v216 = vld [vmem:[%s184 + $0x18] sm:$0xff]
        %v217 = vld [vmem:[%s184 + $0x20] sm:$0xff]
        %v218 = vld [vmem:[%s184 + $0x28] sm:$0xff]
        %v219 = vld [vmem:[%s184 + $0x30] sm:$0xff]
        %v220 = vld [vmem:[%s184 + $0x38] sm:$0xff]
        %v221 = vld [vmem:[%s2] sm:$0xff]
        %v222 = vld [vmem:[%s2 + $0x8] sm:$0xff]
        %v223 = vld [vmem:[%s2 + $0x10] sm:$0xff]
        %v224 = vld [vmem:[%s2 + $0x18] sm:$0xff]
        %226 = vset.pattern.permute.xlu0 0
        %227 = vperm.xlu0 %226, %v221
        %v228 = vpop.permute.xlu0 %227
        %231 = vset.pattern.permute.xlu0 0
        %232 = vperm.xlu0 %231, %v222
        %v233 = vpop.permute.xlu0 %232
        %236 = vset.pattern.permute.xlu0 0
        %237 = vperm.xlu0 %236, %v223
        %v238 = vpop.permute.xlu0 %237
        %241 = vset.pattern.permute.xlu0 0
        %242 = vperm.xlu0 %241, %v224
        %v243 = vpop.permute.xlu0 %242
        %vm245 = vcmask 261120
        %v247 = vsel %vm245, %v209, 0
        %v250 = vsel %vm245, %v210, 0
        %v253 = vsel %vm245, %v211, 0
        %v256 = vsel %vm245, %v212, 0
        %258 = vmatprep.subr.mxu0 0.0
        %259 = vmatpush1.msra.mxu0 0.0
        %260 = vmatprep.subr.mxu0 0.0
        %261 = vmatpush1.msra.mxu0 0.0
        %262 = vmatprep.subr.mxu0 0.0
        %263 = vmatpush1.msra.mxu0 0.0
        %264 = vmatprep.subr.mxu0 0.0
        %265 = vmatpush1.msra.mxu0 0.0
        %266 = vmatprep.subr.mxu0 0.0
        %267 = vmatpush1.msra.mxu0 0.0
        %268 = vmatprep.subr.mxu0 0.0
        %269 = vmatpush1.msra.mxu0 0.0
        %270 = vmatprep.subr.mxu0 0.0
        %271 = vmatpush1.msra.mxu0 0.0
        %272 = vmatprep.subr.mxu0 0.0
        %273 = vmatpush1.msra.mxu0 0.0
        %274 = vmatprep.subr.mxu0 0.0
        %275 = vmatpush1.msra.mxu0 0.0
        %276 = vmatprep.subr.mxu0 0.0
        %277 = vmatpush1.msra.mxu0 0.0
        %278 = vmatprep.subr.mxu0 0.0
        %279 = vmatpush1.msra.mxu0 0.0
        %280 = vmatprep.subr.mxu0 0.0
        %281 = vmatpush1.msra.mxu0 0.0
        %282 = vmatprep.subr.mxu0 %v220
        %283 = vmatpush1.msra.mxu0 %v219
        %284 = vmatprep.subr.mxu0 %v218
        %285 = vmatpush1.msra.mxu0 %v217
        %286 = vmatprep.subr.mxu0 %v216
        %287 = vmatpush1.msra.mxu0 %v215
        %288 = vmatprep.subr.mxu0 %v214
        %289 = vmatpush1.msra.mxu0 %v213
        %290 = vmatprep.subr.mxu0 0.0
        %291 = vmatpush2.msra.mxu0 0.0
        %292 = vmatprep.subr.mxu0 0.0
        %293 = vmatpush2.msra.mxu0 0.0
        %294 = vmatprep.subr.mxu0 0.0
        %295 = vmatpush2.msra.mxu0 0.0
        %296 = vmatprep.subr.mxu0 0.0
        %297 = vmatpush2.msra.mxu0 0.0
        %298 = vmatprep.subr.mxu0 0.0
        %299 = vmatpush2.msra.mxu0 0.0
        %300 = vmatprep.subr.mxu0 0.0
        %301 = vmatpush2.msra.mxu0 0.0
        %302 = vmatprep.subr.mxu0 0.0
        %303 = vmatpush2.msra.mxu0 0.0
        %304 = vmatprep.subr.mxu0 0.0
        %305 = vmatpush2.msra.mxu0 0.0
        %306 = vmatprep.subr.mxu0 0.0
        %307 = vmatpush2.msra.mxu0 0.0
        %308 = vmatprep.subr.mxu0 0.0
        %309 = vmatpush2.msra.mxu0 0.0
        %310 = vmatprep.subr.mxu0 0.0
        %311 = vmatpush2.msra.mxu0 0.0
        %312 = vmatprep.subr.mxu0 0.0
        %313 = vmatpush2.msra.mxu0 0.0
        %314 = vmatprep.subr.mxu0 0.0
        %315 = vmatpush2.msra.mxu0 0.0
        %316 = vmatprep.subr.mxu0 0.0
        %317 = vmatpush2.msra.mxu0 0.0
        %318 = vmatprep.subr.mxu0 0.0
        %319 = vmatpush2.msra.mxu0 0.0
        %320 = vmatprep.subr.mxu0 0.0
        %321 = vmatpush2.msra.mxu0 0.0
        %322 = vmatprep.mubr.f32.mxu0 0.0
        %323 = vmatmul.mubr.f32.gmra.mxu0 %v247
        %v324 = vpop.f32.mrf.mxu0
        %v325 = vadd.f32 %v228, %v324
        %v326 = vpop.f32.mrf.mxu0
        %v327 = vadd.f32 %v228, %v326
        %328 = vmatprep.mubr.f32.mxu0 0.0
        %329 = vmatmul.mubr.f32.gmra.mxu0 %v250
        %v330 = vpop.f32.mrf.mxu0
        %v331 = vadd.f32 %v233, %v330
        %v332 = vpop.f32.mrf.mxu0
        %v333 = vadd.f32 %v233, %v332
        %334 = vmatprep.mubr.f32.mxu0 0.0
        %335 = vmatmul.mubr.f32.gmra.mxu0 %v253
        %v336 = vpop.f32.mrf.mxu0
        %v337 = vadd.f32 %v238, %v336
        %v338 = vpop.f32.mrf.mxu0
        %v339 = vadd.f32 %v238, %v338
        %340 = vmatprep.mubr.f32.mxu0 0.0
        %341 = vmatmul.mubr.f32.gmra.mxu0 %v256
        %v342 = vpop.f32.mrf.mxu0
        %v343 = vadd.f32 %v243, %v342
        %v344 = vpop.f32.mrf.mxu0
        %v345 = vadd.f32 %v243, %v344
        %346 = vdwg.mxu0
        %v347 = vmax.f32 %v325, 0.0
        %v348 = vmax.f32 %v327, 0.0
        %v349 = vmax.f32 %v331, 0.0
        %v350 = vmax.f32 %v333, 0.0
        %v351 = vmax.f32 %v337, 0.0
        %v352 = vmax.f32 %v339, 0.0
        %v353 = vmax.f32 %v343, 0.0
        %v354 = vmax.f32 %v345, 0.0
        %355 = vst [vmem:[%s206] sm:$0xff] %v347
        %356 = vst [vmem:[%s206 + $0x8] sm:$0xff] %v348
        %357 = vst [vmem:[%s206 + $0x10] sm:$0xff] %v349
        %358 = vst [vmem:[%s206 + $0x18] sm:$0xff] %v350
        %359 = vst [vmem:[%s206 + $0x20] sm:$0xff] %v351
        %360 = vst [vmem:[%s206 + $0x28] sm:$0xff] %v352
        %361 = vst [vmem:[%s206 + $0x30] sm:$0xff] %v353
        %362 = vst [vmem:[%s206 + $0x38] sm:$0xff] %v354
        %s363 = sand.u32 %s112, 1
        %s364 = scalar_lea.sflag [#allocation4], %s363
        %s365 = sand.u32 %s112, 1
        %s366 = smul.addr %s365, 64
        %s367 = scalar_lea.vmem [#allocation5], %s366
        // Predicated region
        $region37: #{tpu_custom_call.1} parent=31 // pred_check
          %p368 = pneg %p122
        $region38: #{tpu_custom_call.1} parent=31 // pred_check_branch
          %370 = sbr.rel (%p368) target = $region40
        $region39: #{tpu_custom_call.1} parent=31 // pred_region
          %s371 = smul.u32 2, %s25
          %s373 = ssub.s32 1024, 1024
          %374 = vsyncadd %s364, %s373
          %s375 = smul.addr %s24, 8
          %s376 = sadd.s32 %s371, %s375
          %s377 = smul.addr %s376, 128
          %s378 = scalar_lea.hbm %s3, %s377
          %s379 = sshll.u32 %s367, 4
          %s380 = int_to_ptr.vmem [resolvable:$true] %s379
          %385 = dma.vmem_to_hbm [thread:$0]  %s380, 1024, %s378, %s364, 256, 256, 16
        $region40: #{tpu_custom_call.1} parent=31 // pred_fallthru
          _
      $region32: #{tpu_custom_call.1} parent=5 // pred_fallthru
        _
      %p386 = scmp.le.s32.totalorder 2, %s15
      // Predicated region
      $region41: #{tpu_custom_call.1} parent=5 // pred_check
        %p387 = pneg %p386
      $region42: #{tpu_custom_call.1} parent=5 // pred_check_branch
        %389 = sbr.rel (%p387) target = $region44
      $region43: #{tpu_custom_call.1} parent=5 // pred_region
        %s390 = ssub.s32 %s15, 2
        // Predicated region
        $region45: #{tpu_custom_call.1} parent=43 // pred_check
          %p391 = pneg %p128
        $region46: #{tpu_custom_call.1} parent=43 // pred_check_branch
          %393 = sbr.rel (%p391) target = $region48
        $region47: #{tpu_custom_call.1} parent=43 // pred_region
          %s394 = sand.u32 %s113, 1
          %s395 = scalar_lea.sflag [#allocation4], %s394
          %s396 = sand.u32 %s113, 1
          %s397 = smul.addr %s396, 64
          %s398 = scalar_lea.vmem [#allocation5], %s397
          %399 = dma.done %s395, 1024
        $region48: #{tpu_custom_call.1} parent=43 // pred_fallthru
          _
      $region44: #{tpu_custom_call.1} parent=5 // pred_fallthru
        _
    $region6: #{tpu_custom_call.1} parent=1 // loop_footer
      %s19 = sadd.s32 1, %s15
    $region7: #{tpu_custom_call.1} parent=1 // loop_footer_branch
      %14 = sbr.rel target = $region3
    $region8: #{tpu_custom_call.1} parent=1 // loop_exit
      _
    %400 = vsyncpa [#allocation3], 1
    %s401 = scalar_lea.sflag [#allocation3], 1
    %402 = vsyncpa %s401, 1
    %403 = vsyncpa [#allocation4], 1
    %s404 = scalar_lea.sflag [#allocation4], 1
    %405 = vsyncpa %s404, 1

</llo_original>
